<compile_context>
chip_gen: v6e
topology: v6e:2x2x1
jax: 0.10.0
libtpu: 0.0.40
codegen_flags: <defaults>
</compile_context>

<pallas_src>
import functools

import numpy as np
import jax
import jax.numpy as jnp
from jax.experimental import pallas as pl
from jax.experimental.pallas import tpu as pltpu


# -----------------------------------------------------------------------------
# Antialiased bilinear resize weights (torchvision / PIL semantics).
# -----------------------------------------------------------------------------
def _aa_bilinear_weights(in_size: int, out_size: int) -> np.ndarray:
    """Dense (out_size, in_size) matrix reproducing torchvision's
    resize(..., interpolation=bilinear, antialias=True) along one axis."""
    scale = in_size / out_size
    support = max(scale, 1.0) * 1.0           # bilinear kernel support = 1
    invscale = 1.0 / max(scale, 1.0)          # antialias is a no-op when upsampling
    w = np.zeros((out_size, in_size), dtype=np.float64)
    for i in range(out_size):
        center = scale * (i + 0.5)
        xmin = max(int(center - support + 0.5), 0)      # truncation toward 0 (matches ATen)
        xmax = min(int(center + support + 0.5), in_size)
        idx = np.arange(xmin, xmax)
        vals = 1.0 - np.abs((idx + 0.5 - center) * invscale)   # triangle filter
        vals = np.clip(vals, 0.0, None)
        total = vals.sum()
        if total > 0:
            vals = vals / total
        w[i, xmin:xmax] = vals
    return w


# -----------------------------------------------------------------------------
# Pallas kernel: per grid step, TB planes -> one flattened W-contraction on the
# MXU, then per-plane f32 H-contraction.  Crop is already folded into weights.
# -----------------------------------------------------------------------------
def _resize_kernel(x_ref, wwt_ref, wh_ref, o_ref, *, tb, h_in, w_in, w_out,
                   round_int, clip_lo, clip_hi):
    # One bf16 cast of the whole DMA'd block (single vectorized VPU pass).
    x = x_ref[...].astype(jnp.bfloat16)                         # (tb, H, W)
    # Flattened shared-RHS W-contraction: M = tb*H keeps the MXU rows busy.
    tmp = jnp.dot(x.reshape(tb * h_in, w_in), wwt_ref[...],
                  preferred_element_type=jnp.float32)           # (tb*H, W_out) f32
    tmp = tmp.reshape(tb, h_in, w_out)
    wh = wh_ref[...]                                            # (H_out, H) f32, resident
    for b in range(tb):                                         # static unroll; per-plane H-contraction
        res = jnp.dot(wh, tmp[b], preferred_element_type=jnp.float32)  # (H_out, W_out) f32
        if round_int:
            # torchvision integer semantics: round-to-nearest + saturate.
            res = jnp.clip(jnp.round(res), clip_lo, clip_hi)
        o_ref[b] = res.astype(o_ref.dtype)


def _resident_spec(shape):
    """Constant-index weight spec (DMA'd once, VMEM-resident); single-buffered
    when the running JAX supports pipeline_mode."""
    try:
        return pl.BlockSpec(shape, lambda b: (0, 0), pipeline_mode=pl.Buffered(1))
    except Exception:                        # older JAX without pipeline_mode kwarg
        return pl.BlockSpec(shape, lambda b: (0, 0))


def _pick_tb(B, H, W, H_out, W_out, in_isz, out_isz, budget_bytes, tb_cap):
    """Largest per-step plane count whose working set fits the VMEM budget."""
    def est(tb):
        in_block = 2 * tb * H * W * in_isz                 # double-buffered input DMA
        out_block = 2 * tb * H_out * W_out * out_isz       # double-buffered output DMA
        weights = 2 * (H_out * H * 4 + W * W_out * 2)      # conservative: 2 buffers each
        work = (tb * H * W * 2                             # bf16 copy of the block
                + tb * H * W_out * 4                       # f32 separable intermediate
                + 2 * H_out * W_out * 4)                   # per-plane result / cast temp
        return in_block + out_block + weights + work

    best = 1
    for tb in range(1, tb_cap + 1):
        if est(tb) <= budget_bytes:
            best = tb
    return best


# -----------------------------------------------------------------------------
# Wrapper: center_crop(min(H,W)) + resize(size, antialias=True), NCHW.
# -----------------------------------------------------------------------------
def center_crop_resize(x, size):
    N, C, H, W = x.shape
    crop = min(H, W)
    # torchvision center_crop offset convention.
    top = int(round((H - crop) / 2.0))
    left = int(round((W - crop) / 2.0))

    if isinstance(size, (tuple, list)):
        H_out, W_out = int(size[0]), int(size[1])
    else:
        # Square crop + int size -> (size, size) output (shorter-edge rule).
        H_out = W_out = int(size)

    # Antialias filter matrices with the center crop folded in (exact zeros
    # outside the crop window -> no in-kernel slice, no extra HBM pass).
    wh_np = np.zeros((H_out, H), dtype=np.float64)
    wh_np[:, top:top + crop] = _aa_bilinear_weights(crop, H_out)
    wwt_np = np.zeros((W, W_out), dtype=np.float64)
    wwt_np[left:left + crop, :] = _aa_bilinear_weights(crop, W_out).T
    wh = jnp.asarray(wh_np, dtype=jnp.float32)     # f32: exact second contraction
    wwt = jnp.asarray(wwt_np, dtype=jnp.bfloat16)  # bf16 RHS of the flattened matmul

    B = N * C
    xb = x.reshape(B, H, W)                        # contiguous collapse, free

    # Generation-aware VMEM: one constant feeds both tb selection and the limit.
    try:
        vmem_cap = int(pltpu.get_tpu_info().vmem_capacity_bytes)
    except Exception:
        vmem_cap = 64 * 1024 * 1024                # v7x-safe fallback
    vmem_limit = (vmem_cap * 3) // 4               # ~96 MiB v5e/v6e, ~48 MiB v7x
    budget = int(vmem_limit * 0.85)                # headroom for compiler scratch

    in_isz = jnp.dtype(x.dtype).itemsize
    tb_cap = max(1, min(B // 2, 64)) if B >= 2 else 1   # grid >= 2 -> both v7x cores busy
    tb = _pick_tb(B, H, W, H_out, W_out, in_isz, in_isz, budget, tb_cap)
    grid = (pl.cdiv(B, tb),)                       # tb need not divide B

    out_dtype = jnp.dtype(x.dtype)
    round_int = bool(jnp.issubdtype(out_dtype, jnp.integer))
    if round_int:
        info = jnp.iinfo(out_dtype)
        clip_lo, clip_hi = float(info.min), float(info.max)
    else:
        clip_lo = clip_hi = 0.0

    kernel = functools.partial(
        _resize_kernel, tb=tb, h_in=H, w_in=W, w_out=W_out,
        round_int=round_int, clip_lo=clip_lo, clip_hi=clip_hi)

    out = pl.pallas_call(
        kernel,
        out_shape=jax.ShapeDtypeStruct((B, H_out, W_out), x.dtype),
        grid_spec=pltpu.PrefetchScalarGridSpec(
            num_scalar_prefetch=0,
            grid=grid,
            in_specs=[
                # Full (H, W) planes; crop is folded into the weights.
                pl.BlockSpec((tb, H, W), lambda b: (b, 0, 0)),
                _resident_spec((W, W_out)),        # W_w^T, bf16
                _resident_spec((H_out, H)),        # W_h,  f32
            ],
            out_specs=pl.BlockSpec((tb, H_out, W_out), lambda b: (b, 0, 0)),
        ),
        compiler_params=pltpu.CompilerParams(
            dimension_semantics=("parallel",),     # plane axis is embarrassingly parallel
            vmem_limit_bytes=int(vmem_limit),
        ),
    )(xb, wwt, wh)
    return out.reshape(N, C, H_out, W_out)


class CenterCropResize:
    """Pallas analogue of the PyTorch CenterCropResize module."""

    def __init__(self, size):
        self.size = size

    def __call__(self, x):
        return center_crop_resize(x, self.size)


# -----------------------------------------------------------------------------
# Demo / self-check
# -----------------------------------------------------------------------------
if __name__ == "__main__":
    key = jax.random.PRNGKey(0)
    # NCHW with non-square spatial so the (folded) center crop is exercised:
    # 32x16 -> center crop 16x16 (top=8, left=0) -> antialiased resize to 8x8.
    x = jax.random.normal(key, (2, 4, 32, 16), dtype=jnp.float32)
    size = 8

    mod = CenterCropResize(size)
    out = jax.block_until_ready(mod(x))
    assert out.shape == (2, 4, size, size), out.shape

    # Pure-JAX f32 reference with the same antialias weights and an explicit
    # crop.  The kernel's first contraction uses bf16 operands (data + W_w),
    # the second is pure f32, hence the modest tolerance.
    N, C, H, W = x.shape
    crop = min(H, W)
    top = int(round((H - crop) / 2.0))
    left = int(round((W - crop) / 2.0))
    w_h = jnp.asarray(_aa_bilinear_weights(crop, size), jnp.float32)
    w_w = jnp.asarray(_aa_bilinear_weights(crop, size), jnp.float32)
    cropped = x[..., top:top + crop, left:left + crop].astype(jnp.float32)
    ref = jnp.einsum("oh,nchw,qw->ncoq", w_h, cropped, w_w)
    np.testing.assert_allclose(np.asarray(out, np.float32), np.asarray(ref),
                               atol=5e-2, rtol=0.0)

    print("KERNEL_OK")
</pallas_src>

<mosaic_0001>
module attributes {stable_mosaic.version = 11 : i64} {
  func.func @_resize_kernel(%arg0: i32, %arg1: memref<4x32x16xf32, #tpu.memory_space<vmem>>, %arg2: memref<16x8xbf16, #tpu.memory_space<vmem>>, %arg3: memref<8x32xf32, #tpu.memory_space<vmem>>, %arg4: memref<4x8x8xf32, #tpu.memory_space<vmem>>) attributes {dimension_semantics = [#tpu.dimension_semantics<parallel>], iteration_bounds = array<i64: 2>, scalar_prefetch = 0 : i64, scratch_operands = 0 : i64, tpu.core_type = #tpu.core_type<tc>, window_params = [{transform_indices = @transform_0, window_bounds = array<i64: 4, 32, 16>}, {pipeline_mode = #tpu.pipeline_mode<synchronous>, transform_indices = @transform_1, window_bounds = array<i64: 16, 8>}, {pipeline_mode = #tpu.pipeline_mode<synchronous>, transform_indices = @transform_2, window_bounds = array<i64: 8, 32>}, {transform_indices = @transform_3, window_bounds = array<i64: 4, 8, 8>}]} {
    %c0 = arith.constant 0 : index
    %c0_0 = arith.constant 0 : index
    %c0_1 = arith.constant 0 : index
    %0 = vector.load %arg1[%c0, %c0_0, %c0_1] : memref<4x32x16xf32, #tpu.memory_space<vmem>>, vector<4x32x16xf32>
    %1 = arith.truncf %0 : vector<4x32x16xf32> to vector<4x32x16xbf16>
    %2 = vector.shape_cast %1 : vector<4x32x16xbf16> to vector<128x16xbf16>
    %c0_2 = arith.constant 0 : index
    %c0_3 = arith.constant 0 : index
    %3 = vector.load %arg2[%c0_2, %c0_3] : memref<16x8xbf16, #tpu.memory_space<vmem>>, vector<16x8xbf16>
    %cst = arith.constant dense<0.000000e+00> : vector<128x8xf32>
    %4 = tpu.matmul %2, %3, %cst {dimension_numbers = #tpu.dot_dimension_numbers<[1], [0], [0], [1], [0, 0, 1, 1], [], []>} : vector<128x16xbf16>, vector<16x8xbf16>, vector<128x8xf32> -> vector<128x8xf32>
    %5 = vector.shape_cast %4 : vector<128x8xf32> to vector<4x32x8xf32>
    %c0_4 = arith.constant 0 : index
    %c0_5 = arith.constant 0 : index
    %6 = vector.load %arg3[%c0_4, %c0_5] : memref<8x32xf32, #tpu.memory_space<vmem>>, vector<8x32xf32>
    %7 = vector.extract_strided_slice %5 {offsets = [0, 0, 0], sizes = [1, 32, 8], strides = [1, 1, 1]} : vector<4x32x8xf32> to vector<1x32x8xf32>
    %8 = vector.shape_cast %7 : vector<1x32x8xf32> to vector<32x8xf32>
    %cst_6 = arith.constant dense<0.000000e+00> : vector<8x8xf32>
    %9 = tpu.matmul %6, %8, %cst_6 {dimension_numbers = #tpu.dot_dimension_numbers<[1], [0], [0], [1], [0, 0, 1, 1], [], []>} : vector<8x32xf32>, vector<32x8xf32>, vector<8x8xf32> -> vector<8x8xf32>
    %c0_7 = arith.constant 0 : index
    %c0_8 = arith.constant 0 : index
    %c0_9 = arith.constant 0 : index
    %10 = vector.load %arg4[%c0_7, %c0_8, %c0_9] : memref<4x8x8xf32, #tpu.memory_space<vmem>>, vector<1x8x8xf32>
    %11 = vector.shape_cast %10 : vector<1x8x8xf32> to vector<8x8xf32>
    %12 = vector.shape_cast %9 : vector<8x8xf32> to vector<1x8x8xf32>
    tpu.vector_store %arg4[%c0_7, %c0_8, %c0_9], %12 {strides = array<i32>} : memref<4x8x8xf32, #tpu.memory_space<vmem>>, vector<1x8x8xf32>,
    %13 = vector.extract_strided_slice %5 {offsets = [1, 0, 0], sizes = [1, 32, 8], strides = [1, 1, 1]} : vector<4x32x8xf32> to vector<1x32x8xf32>
    %14 = vector.shape_cast %13 : vector<1x32x8xf32> to vector<32x8xf32>
    %cst_10 = arith.constant dense<0.000000e+00> : vector<8x8xf32>
    %15 = tpu.matmul %6, %14, %cst_10 {dimension_numbers = #tpu.dot_dimension_numbers<[1], [0], [0], [1], [0, 0, 1, 1], [], []>} : vector<8x32xf32>, vector<32x8xf32>, vector<8x8xf32> -> vector<8x8xf32>
    %c1 = arith.constant 1 : index
    %c0_11 = arith.constant 0 : index
    %c0_12 = arith.constant 0 : index
    %16 = vector.load %arg4[%c1, %c0_11, %c0_12] : memref<4x8x8xf32, #tpu.memory_space<vmem>>, vector<1x8x8xf32>
    %17 = vector.shape_cast %16 : vector<1x8x8xf32> to vector<8x8xf32>
    %18 = vector.shape_cast %15 : vector<8x8xf32> to vector<1x8x8xf32>
    tpu.vector_store %arg4[%c1, %c0_11, %c0_12], %18 {strides = array<i32>} : memref<4x8x8xf32, #tpu.memory_space<vmem>>, vector<1x8x8xf32>,
    %19 = vector.extract_strided_slice %5 {offsets = [2, 0, 0], sizes = [1, 32, 8], strides = [1, 1, 1]} : vector<4x32x8xf32> to vector<1x32x8xf32>
    %20 = vector.shape_cast %19 : vector<1x32x8xf32> to vector<32x8xf32>
    %cst_13 = arith.constant dense<0.000000e+00> : vector<8x8xf32>
    %21 = tpu.matmul %6, %20, %cst_13 {dimension_numbers = #tpu.dot_dimension_numbers<[1], [0], [0], [1], [0, 0, 1, 1], [], []>} : vector<8x32xf32>, vector<32x8xf32>, vector<8x8xf32> -> vector<8x8xf32>
    %c2 = arith.constant 2 : index
    %c0_14 = arith.constant 0 : index
    %c0_15 = arith.constant 0 : index
    %22 = vector.load %arg4[%c2, %c0_14, %c0_15] : memref<4x8x8xf32, #tpu.memory_space<vmem>>, vector<1x8x8xf32>
    %23 = vector.shape_cast %22 : vector<1x8x8xf32> to vector<8x8xf32>
    %24 = vector.shape_cast %21 : vector<8x8xf32> to vector<1x8x8xf32>
    tpu.vector_store %arg4[%c2, %c0_14, %c0_15], %24 {strides = array<i32>} : memref<4x8x8xf32, #tpu.memory_space<vmem>>, vector<1x8x8xf32>,
    %25 = vector.extract_strided_slice %5 {offsets = [3, 0, 0], sizes = [1, 32, 8], strides = [1, 1, 1]} : vector<4x32x8xf32> to vector<1x32x8xf32>
    %26 = vector.shape_cast %25 : vector<1x32x8xf32> to vector<32x8xf32>
    %cst_16 = arith.constant dense<0.000000e+00> : vector<8x8xf32>
    %27 = tpu.matmul %6, %26, %cst_16 {dimension_numbers = #tpu.dot_dimension_numbers<[1], [0], [0], [1], [0, 0, 1, 1], [], []>} : vector<8x32xf32>, vector<32x8xf32>, vector<8x8xf32> -> vector<8x8xf32>
    %c3 = arith.constant 3 : index
    %c0_17 = arith.constant 0 : index
    %c0_18 = arith.constant 0 : index
    %28 = vector.load %arg4[%c3, %c0_17, %c0_18] : memref<4x8x8xf32, #tpu.memory_space<vmem>>, vector<1x8x8xf32>
    %29 = vector.shape_cast %28 : vector<1x8x8xf32> to vector<8x8xf32>
    %30 = vector.shape_cast %27 : vector<8x8xf32> to vector<1x8x8xf32>
    tpu.vector_store %arg4[%c3, %c0_17, %c0_18], %30 {strides = array<i32>} : memref<4x8x8xf32, #tpu.memory_space<vmem>>, vector<1x8x8xf32>,
    return
  }
  func.func @transform_0(%arg0: i32) -> (i32, i32, i32) {
    %c0_i32 = arith.constant 0 : i32
    %c0_i32_0 = arith.constant 0 : i32
    %c0_i32_1 = arith.constant 0 : i32
    return %arg0, %c0_i32, %c0_i32_0 : i32, i32, i32
  }
  func.func @transform_1(%arg0: i32) -> (i32, i32) {
    %c0_i32 = arith.constant 0 : i32
    %c0_i32_0 = arith.constant 0 : i32
    %c0_i32_1 = arith.constant 0 : i32
    return %c0_i32, %c0_i32_0 : i32, i32
  }
  func.func @transform_2(%arg0: i32) -> (i32, i32) {
    %c0_i32 = arith.constant 0 : i32
    %c0_i32_0 = arith.constant 0 : i32
    %c0_i32_1 = arith.constant 0 : i32
    return %c0_i32, %c0_i32_0 : i32, i32
  }
  func.func @transform_3(%arg0: i32) -> (i32, i32, i32) {
    %c0_i32 = arith.constant 0 : i32
    %c0_i32_0 = arith.constant 0 : i32
    %c0_i32_1 = arith.constant 0 : i32
    return %arg0, %c0_i32, %c0_i32_0 : i32, i32, i32
  }
}

</mosaic_0001>

<llo_original>
// kernel: tpu_custom_call.1
$region0: #{tpu_custom_call.1}
  #allocation0 [shape = 'u32[]', space=smem, size = 0x4, offset = 0x4, fixed_abs, tag = 'smem constant byte address 0x4 - core index']
  #allocation1 [shape = 'u32[144,128]{1,0:T(1,128)}', space=vmem, size = 0x12000, scoped, tag = 'internal scratch']
  %s0 = inlined_call_operand.vmem [shape: f32[8,32,16], index: 0, kind: input, shape index: {}]
  %s1 = inlined_call_operand.vmem [shape: bf16[16,8], index: 1, kind: input, shape index: {}]
  %s2 = inlined_call_operand.vmem [shape: f32[8,32], index: 2, kind: input, shape index: {}]
  %s3 = inlined_call_operand.hbm [shape: f32[8,8,8], index: 3, kind: output, shape index: {}]
  %s4 = sld [smem:[#allocation0]]
  $region45: #{tpu_custom_call.1} parent=0
    _
  %s6 = ssub.s32 1, %s4
  %s7 = scalar_select 0, %s6, %s4
  $region1: #{tpu_custom_call.1} parent=0
    #allocation2 [shape = 'u8[32768]{0}', space=vmem, size = 0x8000, scoped, tag = 'output window, operand 0']
    #allocation3 [shape = 's32[2]{0}', space=sflag, size = 0x8, scoped, tag = 'scoped memory for tpu_custom_call.1']
    %8 = vsyncpa [#allocation3], 0
    %s9 = scalar_lea.sflag [#allocation3], 1
    %10 = vsyncpa %s9, 0
    loop: start=0, step=1, limit=4
    $region2: #{tpu_custom_call.1} parent=1 // loop_pre_header
      _
    $region3: #{tpu_custom_call.1} parent=1 // loop_header
      %s12 = sphi 0, %s16
      %p13 = scmp.ge.s32.totalorder %s12, 4
      %s22 = sphi 0, %s24
      %s25 = sphi 0, %s22
      %s26 = sphi 0, %s25
      %s42 = sphi 0, %s26
      %s46 = sphi 0, %s46
      %s48 = sphi 0, %s46
      %s49 = sphi 0, %s48
      %s63 = sphi 0, %s49
      %s67 = sphi 0, %s67
      %s69 = sphi 0, %s67
      %s70 = sphi 0, %s69
      %s84 = sphi 0, %s70
      %s90 = sphi 0, %s92
      %s93 = sphi 0, %s90
      %s94 = sphi 0, %s93
      %s110 = sphi 0, %s94
    $region4: #{tpu_custom_call.1} parent=1 // loop_header_branch
      %15 = sbr.rel (%p13) target = $region8
    $region5: #{tpu_custom_call.1} parent=1 // loop_body
      %s17 = ssub.s32 %s12, 1
      %s18 = ssub.s32 %s12, 2
      %s19 = sadd.s32 %s12, 1
      %s20 = ssub.s32 %s12, %s19
      %p21 = scmp.eq.s32.totalorder %s20, 0
      %s23 = sadd.s32 %s22, 1
      %s24 = scalar_select %p21, %s22, %s23
      %p27 = pneg %p21
      %p28 = scmp.eq.s32.totalorder %s12, 1
      %p29 = por %p27, %p28
      %p30 = scmp.ne.s32.totalorder %s22, %s25
      %p31 = scmp.eq.s32.totalorder %s12, 0
      %p32 = por %p30, %p31
      %p33 = scmp.ne.s32.totalorder %s22, %s25
      %p34 = scmp.eq.s32.totalorder %s17, 1
      %p35 = por %p33, %p34
      %p36 = scmp.ne.s32.totalorder %s25, %s26
      %p37 = scmp.eq.s32.totalorder %s17, 0
      %p38 = por %p36, %p37
      %p39 = scmp.ne.s32.totalorder %s25, %s26
      %p40 = scmp.eq.s32.totalorder %s18, 1
      %p41 = por %p39, %p40
      %p43 = scmp.ne.s32.totalorder %s26, %s42
      %p44 = scmp.eq.s32.totalorder %s18, 0
      %p45 = por %p43, %p44
      %s47 = sadd.s32 %s46, 1
      %p50 = scmp.eq.s32.totalorder %s12, 1
      %p51 = scmp.ne.s32.totalorder %s46, %s48
      %p52 = scmp.eq.s32.totalorder %s12, 0
      %p53 = por %p51, %p52
      %p54 = scmp.ne.s32.totalorder %s46, %s48
      %p55 = scmp.eq.s32.totalorder %s17, 1
      %p56 = por %p54, %p55
      %p57 = scmp.ne.s32.totalorder %s48, %s49
      %p58 = scmp.eq.s32.totalorder %s17, 0
      %p59 = por %p57, %p58
      %p60 = scmp.ne.s32.totalorder %s48, %s49
      %p61 = scmp.eq.s32.totalorder %s18, 1
      %p62 = por %p60, %p61
      %p64 = scmp.ne.s32.totalorder %s49, %s63
      %p65 = scmp.eq.s32.totalorder %s18, 0
      %p66 = por %p64, %p65
      %s68 = sadd.s32 %s67, 1
      %p71 = scmp.eq.s32.totalorder %s12, 1
      %p72 = scmp.ne.s32.totalorder %s67, %s69
      %p73 = scmp.eq.s32.totalorder %s12, 0
      %p74 = por %p72, %p73
      %p75 = scmp.ne.s32.totalorder %s67, %s69
      %p76 = scmp.eq.s32.totalorder %s17, 1
      %p77 = por %p75, %p76
      %p78 = scmp.ne.s32.totalorder %s69, %s70
      %p79 = scmp.eq.s32.totalorder %s17, 0
      %p80 = por %p78, %p79
      %p81 = scmp.ne.s32.totalorder %s69, %s70
      %p82 = scmp.eq.s32.totalorder %s18, 1
      %p83 = por %p81, %p82
      %p85 = scmp.ne.s32.totalorder %s70, %s84
      %p86 = scmp.eq.s32.totalorder %s18, 0
      %p87 = por %p85, %p86
      %s88 = ssub.s32 %s12, %s19
      %p89 = scmp.eq.s32.totalorder %s88, 0
      %s91 = sadd.s32 %s90, 1
      %s92 = scalar_select %p89, %s90, %s91
      %p95 = pneg %p89
      %p96 = scmp.eq.s32.totalorder %s12, 1
      %p97 = por %p95, %p96
      %p98 = scmp.ne.s32.totalorder %s90, %s93
      %p99 = scmp.eq.s32.totalorder %s12, 0
      %p100 = por %p98, %p99
      %p101 = scmp.ne.s32.totalorder %s90, %s93
      %p102 = scmp.eq.s32.totalorder %s17, 1
      %p103 = por %p101, %p102
      %p104 = scmp.ne.s32.totalorder %s93, %s94
      %p105 = scmp.eq.s32.totalorder %s17, 0
      %p106 = por %p104, %p105
      %p107 = scmp.ne.s32.totalorder %s93, %s94
      %p108 = scmp.eq.s32.totalorder %s18, 1
      %p109 = por %p107, %p108
      %p111 = scmp.ne.s32.totalorder %s94, %s110
      %p112 = scmp.eq.s32.totalorder %s18, 0
      %p113 = por %p111, %p112
      %p114 = scmp.le.s32.totalorder 1, %s12
      %p115 = scmp.lt.s32.totalorder %s12, 3
      %p116 = pnand %p114, %p115
      %p117 = pneg %p116
      // Predicated region
      $region9: #{tpu_custom_call.1} parent=5 // pred_check
        _
      $region10: #{tpu_custom_call.1} parent=5 // pred_check_branch
        %119 = sbr.rel (%p116) target = $region12
      $region11: #{tpu_custom_call.1} parent=5 // pred_region
        %s120 = ssub.s32 %s12, 1
        // Predicated region
        $region13: #{tpu_custom_call.1} parent=11 // pred_check
          %p121 = pneg %p59
        $region14: #{tpu_custom_call.1} parent=11 // pred_check_branch
          %123 = sbr.rel (%p121) target = $region16
        $region15: #{tpu_custom_call.1} parent=11 // pred_region
          _
        $region16: #{tpu_custom_call.1} parent=11 // pred_fallthru
          _
        // Predicated region
        $region17: #{tpu_custom_call.1} parent=11 // pred_check
          %p124 = pneg %p80
        $region18: #{tpu_custom_call.1} parent=11 // pred_check_branch
          %126 = sbr.rel (%p124) target = $region20
        $region19: #{tpu_custom_call.1} parent=11 // pred_region
          _
        $region20: #{tpu_custom_call.1} parent=11 // pred_fallthru
          _
      $region12: #{tpu_custom_call.1} parent=5 // pred_fallthru
        _
      %p127 = scmp.lt.s32.totalorder %s12, 2
      // Predicated region
      $region21: #{tpu_custom_call.1} parent=5 // pred_check
        %p128 = pneg %p127
      $region22: #{tpu_custom_call.1} parent=5 // pred_check_branch
        %130 = sbr.rel (%p128) target = $region24
      $region23: #{tpu_custom_call.1} parent=5 // pred_region
        // Predicated region
        $region25: #{tpu_custom_call.1} parent=23 // pred_check
          %p131 = pneg %p32
        $region26: #{tpu_custom_call.1} parent=23 // pred_check_branch
          %133 = sbr.rel (%p131) target = $region28
        $region27: #{tpu_custom_call.1} parent=23 // pred_region
          %s134 = smul.u32 4, %s12
          %p135 = scmp.lt.s32.totalorder %s134, 7
          %s136 = scalar_select %p135, %s134, 7
          %s137 = smul.addr %s136, 4
          %s138 = smul.addr %s137, 8
          %s139 = scalar_lea.vmem %s0, %s138
          %s140 = smul.u32 4, %s12
        $region28: #{tpu_custom_call.1} parent=23 // pred_fallthru
          _
      $region24: #{tpu_custom_call.1} parent=5 // pred_fallthru
        _
      %p141 = scmp.le.s32.totalorder 1, %s12
      %p142 = scmp.lt.s32.totalorder %s12, 3
      %p143 = pnand %p141, %p142
      %p144 = pneg %p143
      // Predicated region
      $region29: #{tpu_custom_call.1} parent=5 // pred_check
        _
      $region30: #{tpu_custom_call.1} parent=5 // pred_check_branch
        %146 = sbr.rel (%p143) target = $region32
      $region31: #{tpu_custom_call.1} parent=5 // pred_region
        %s147 = ssub.s32 %s12, 1
        %s148 = smul.u32 4, %s17
        %p149 = scmp.lt.s32.totalorder %s148, 7
        %s150 = scalar_select %p149, %s148, 7
        %s151 = smul.addr %s150, 4
        %s152 = smul.addr %s151, 8
        %s153 = scalar_lea.vmem %s0, %s152
        %p154 = pneg %p38
        %p155 = pneg %p35
        %p156 = pneg %p59
        %p157 = pneg %p56
        %p158 = pneg %p80
        %p159 = pneg %p77
        %p160 = pneg %p106
        %p161 = pneg %p103
        %s162 = sand.u32 %s93, 1
        %s163 = scalar_lea.sflag [#allocation3], %s162
        %s164 = sand.u32 %s93, 1
        %s165 = smul.addr %s164, 32
        %s166 = scalar_lea.vmem [#allocation2], %s165
        %s167 = smul.u32 4, %s17
        %p168 = scmp.lt.s32.totalorder %s167, 7
        %s169 = scalar_select %p168, %s167, 7
        %s170 = smul.addr %s169, 4
        %s171 = smul.addr %s170, 8
        %s172 = scalar_lea.vmem %s0, %s171
        %s173 = smul.u32 4, %s17
        %s174 = smul.u32 4, %s17
        %v176 = vld [vmem:[%s172] sm:$0xff]
        %v177 = vld [vmem:[%s172 + $0x8] sm:$0xff]
        %v178 = vld [vmem:[%s172 + $0x10] sm:$0xff]
        %v179 = vld [vmem:[%s172 + $0x18] sm:$0xff]
        %v180 = vld [vmem:[%s172 + $0x20] sm:$0xff]
        %v181 = vld [vmem:[%s172 + $0x28] sm:$0xff]
        %v182 = vld [vmem:[%s172 + $0x30] sm:$0xff]
        %v183 = vld [vmem:[%s172 + $0x38] sm:$0xff]
        %v184 = vld [vmem:[%s172 + $0x40] sm:$0xff]
        %v185 = vld [vmem:[%s172 + $0x48] sm:$0xff]
        %v186 = vld [vmem:[%s172 + $0x50] sm:$0xff]
        %v187 = vld [vmem:[%s172 + $0x58] sm:$0xff]
        %v188 = vld [vmem:[%s172 + $0x60] sm:$0xff]
        %v189 = vld [vmem:[%s172 + $0x68] sm:$0xff]
        %v190 = vld [vmem:[%s172 + $0x70] sm:$0xff]
        %v191 = vld [vmem:[%s172 + $0x78] sm:$0xff]
        %v192 = vpack.c.bf16 %v177, %v176
        %v193 = vpack.c.bf16 %v179, %v178
        %v194 = vpack.c.bf16 %v181, %v180
        %v195 = vpack.c.bf16 %v183, %v182
        %v196 = vpack.c.bf16 %v185, %v184
        %v197 = vpack.c.bf16 %v187, %v186
        %v198 = vpack.c.bf16 %v189, %v188
        %v199 = vpack.c.bf16 %v191, %v190
        %v200 = vld [vmem:[%s1] sm:$0xf]
        %v201 = vld [vmem:[%s1 + $0x4] sm:$0xf]
        %v204 = vunpack.c.l.b16 %v200
        %v205 = vunpack.c.l.b16 %v201
        %v206 = vpack.c.b16 %v205, %v204
        %vm208 = vcmask 130048
        %v210 = vsel %vm208, %v192, 0
        %v213 = vsel %vm208, %v193, 0
        %v216 = vsel %vm208, %v194, 0
        %v219 = vsel %vm208, %v195, 0
        %v222 = vsel %vm208, %v196, 0
        %v225 = vsel %vm208, %v197, 0
        %v228 = vsel %vm208, %v198, 0
        %v231 = vsel %vm208, %v199, 0
        %233 = vmatprep.subr.bf16.mxu0 0
        %234 = vmatpush1.bf16.msra.mxu0 0
        %235 = vmatprep.subr.bf16.mxu0 0
        %236 = vmatpush1.bf16.msra.mxu0 0
        %237 = vmatprep.subr.bf16.mxu0 0
        %238 = vmatpush1.bf16.msra.mxu0 0
        %239 = vmatprep.subr.bf16.mxu0 0
        %240 = vmatpush1.bf16.msra.mxu0 0
        %241 = vmatprep.subr.bf16.mxu0 0
        %242 = vmatpush1.bf16.msra.mxu0 0
        %243 = vmatprep.subr.bf16.mxu0 0
        %244 = vmatpush1.bf16.msra.mxu0 0
        %245 = vmatprep.subr.bf16.mxu0 0
        %246 = vmatpush1.bf16.msra.mxu0 0
        %247 = vmatprep.subr.bf16.mxu0 0
        %248 = vmatpush1.bf16.msra.mxu0 %v206
        %249 = vmatprep.subr.bf16.mxu0 0
        %250 = vmatpush2.bf16.msra.mxu0 0
        %251 = vmatprep.subr.bf16.mxu0 0
        %252 = vmatpush2.bf16.msra.mxu0 0
        %253 = vmatprep.subr.bf16.mxu0 0
        %254 = vmatpush2.bf16.msra.mxu0 0
        %255 = vmatprep.subr.bf16.mxu0 0
        %256 = vmatpush2.bf16.msra.mxu0 0
        %257 = vmatprep.subr.bf16.mxu0 0
        %258 = vmatpush2.bf16.msra.mxu0 0
        %259 = vmatprep.subr.bf16.mxu0 0
        %260 = vmatpush2.bf16.msra.mxu0 0
        %261 = vmatprep.subr.bf16.mxu0 0
        %262 = vmatpush2.bf16.msra.mxu0 0
        %263 = vmatprep.subr.bf16.mxu0 0
        %264 = vmatpush2.bf16.msra.mxu0 0
        %265 = vmatprep.mubr.bf16.mxu0 0
        %266 = vmatmul.mubr.bf16.gmra.mxu0 %v210
        %v267 = vpop.f32.mrf.mxu0
        %v268 = vadd.f32 0.0, %v267
        %v269 = vpop.f32.mrf.mxu0
        %v270 = vpop.f32.mrf.mxu0
        %v271 = vadd.f32 0.0, %v270
        %v272 = vpop.f32.mrf.mxu0
        %273 = vmatprep.mubr.bf16.mxu0 0
        %274 = vmatmul.mubr.bf16.gmra.mxu0 %v213
        %v275 = vpop.f32.mrf.mxu0
        %v276 = vadd.f32 0.0, %v275
        %v277 = vpop.f32.mrf.mxu0
        %v278 = vpop.f32.mrf.mxu0
        %v279 = vadd.f32 0.0, %v278
        %v280 = vpop.f32.mrf.mxu0
        %281 = vmatprep.mubr.bf16.mxu0 0
        %282 = vmatmul.mubr.bf16.gmra.mxu0 %v216
        %v283 = vpop.f32.mrf.mxu0
        %v284 = vadd.f32 0.0, %v283
        %v285 = vpop.f32.mrf.mxu0
        %v286 = vpop.f32.mrf.mxu0
        %v287 = vadd.f32 0.0, %v286
        %v288 = vpop.f32.mrf.mxu0
        %289 = vmatprep.mubr.bf16.mxu0 0
        %290 = vmatmul.mubr.bf16.gmra.mxu0 %v219
        %v291 = vpop.f32.mrf.mxu0
        %v292 = vadd.f32 0.0, %v291
        %v293 = vpop.f32.mrf.mxu0
        %v294 = vpop.f32.mrf.mxu0
        %v295 = vadd.f32 0.0, %v294
        %v296 = vpop.f32.mrf.mxu0
        %297 = vmatprep.mubr.bf16.mxu0 0
        %298 = vmatmul.mubr.bf16.gmra.mxu0 %v222
        %v299 = vpop.f32.mrf.mxu0
        %v300 = vadd.f32 0.0, %v299
        %v301 = vpop.f32.mrf.mxu0
        %v302 = vpop.f32.mrf.mxu0
        %v303 = vadd.f32 0.0, %v302
        %v304 = vpop.f32.mrf.mxu0
        %305 = vmatprep.mubr.bf16.mxu0 0
        %306 = vmatmul.mubr.bf16.gmra.mxu0 %v225
        %v307 = vpop.f32.mrf.mxu0
        %v308 = vadd.f32 0.0, %v307
        %v309 = vpop.f32.mrf.mxu0
        %v310 = vpop.f32.mrf.mxu0
        %v311 = vadd.f32 0.0, %v310
        %v312 = vpop.f32.mrf.mxu0
        %313 = vmatprep.mubr.bf16.mxu0 0
        %314 = vmatmul.mubr.bf16.gmra.mxu0 %v228
        %v315 = vpop.f32.mrf.mxu0
        %v316 = vadd.f32 0.0, %v315
        %v317 = vpop.f32.mrf.mxu0
        %v318 = vpop.f32.mrf.mxu0
        %v319 = vadd.f32 0.0, %v318
        %v320 = vpop.f32.mrf.mxu0
        %321 = vmatprep.mubr.bf16.mxu0 0
        %322 = vmatmul.mubr.bf16.gmra.mxu0 %v231
        %v323 = vpop.f32.mrf.mxu0
        %v324 = vadd.f32 0.0, %v323
        %v325 = vpop.f32.mrf.mxu0
        %v326 = vpop.f32.mrf.mxu0
        %v327 = vadd.f32 0.0, %v326
        %v328 = vpop.f32.mrf.mxu0
        %329 = vdwg.mxu0
        %v330 = vld [vmem:[%s2] sm:$0xff]
        %vm331 = vcmask 261120
        %v333 = vsel %vm331, %v330, 0
        %335 = vmatprep.subr.mxu0 0.0
        %336 = vmatpush1.msra.mxu0 0.0
        %337 = vmatprep.subr.mxu0 0.0
        %338 = vmatpush1.msra.mxu0 0.0
        %339 = vmatprep.subr.mxu0 0.0
        %340 = vmatpush1.msra.mxu0 0.0
        %341 = vmatprep.subr.mxu0 0.0
        %342 = vmatpush1.msra.mxu0 0.0
        %343 = vmatprep.subr.mxu0 0.0
        %344 = vmatpush1.msra.mxu0 0.0
        %345 = vmatprep.subr.mxu0 0.0
        %346 = vmatpush1.msra.mxu0 0.0
        %347 = vmatprep.subr.mxu0 0.0
        %348 = vmatpush1.msra.mxu0 0.0
        %349 = vmatprep.subr.mxu0 0.0
        %350 = vmatpush1.msra.mxu0 0.0
        %351 = vmatprep.subr.mxu0 0.0
        %352 = vmatpush1.msra.mxu0 0.0
        %353 = vmatprep.subr.mxu0 0.0
        %354 = vmatpush1.msra.mxu0 0.0
        %355 = vmatprep.subr.mxu0 0.0
        %356 = vmatpush1.msra.mxu0 0.0
        %357 = vmatprep.subr.mxu0 0.0
        %358 = vmatpush1.msra.mxu0 0.0
        %359 = vmatprep.subr.mxu0 0.0
        %360 = vmatpush1.msra.mxu0 %v279
        %361 = vmatprep.subr.mxu0 0.0
        %362 = vmatpush1.msra.mxu0 %v276
        %363 = vmatprep.subr.mxu0 0.0
        %364 = vmatpush1.msra.mxu0 %v271
        %365 = vmatprep.subr.mxu0 0.0
        %366 = vmatpush1.msra.mxu0 %v268
        %367 = vmatprep.subr.mxu0 0.0
        %368 = vmatpush2.msra.mxu0 0.0
        %369 = vmatprep.subr.mxu0 0.0
        %370 = vmatpush2.msra.mxu0 0.0
        %371 = vmatprep.subr.mxu0 0.0
        %372 = vmatpush2.msra.mxu0 0.0
        %373 = vmatprep.subr.mxu0 0.0
        %374 = vmatpush2.msra.mxu0 0.0
        %375 = vmatprep.subr.mxu0 0.0
        %376 = vmatpush2.msra.mxu0 0.0
        %377 = vmatprep.subr.mxu0 0.0
        %378 = vmatpush2.msra.mxu0 0.0
        %379 = vmatprep.subr.mxu0 0.0
        %380 = vmatpush2.msra.mxu0 0.0
        %381 = vmatprep.subr.mxu0 0.0
        %382 = vmatpush2.msra.mxu0 0.0
        %383 = vmatprep.subr.mxu0 0.0
        %384 = vmatpush2.msra.mxu0 0.0
        %385 = vmatprep.subr.mxu0 0.0
        %386 = vmatpush2.msra.mxu0 0.0
        %387 = vmatprep.subr.mxu0 0.0
        %388 = vmatpush2.msra.mxu0 0.0
        %389 = vmatprep.subr.mxu0 0.0
        %390 = vmatpush2.msra.mxu0 0.0
        %391 = vmatprep.subr.mxu0 0.0
        %392 = vmatpush2.msra.mxu0 0.0
        %393 = vmatprep.subr.mxu0 0.0
        %394 = vmatpush2.msra.mxu0 0.0
        %395 = vmatprep.subr.mxu0 0.0
        %396 = vmatpush2.msra.mxu0 0.0
        %397 = vmatprep.subr.mxu0 0.0
        %398 = vmatpush2.msra.mxu0 0.0
        %399 = vmatprep.mubr.f32.mxu0 0.0
        %400 = vmatmul.mubr.f32.gmra.mxu0 %v333
        %v401 = vpop.f32.mrf.mxu0
        %v402 = vadd.f32 0.0, %v401
        %v403 = vpop.f32.mrf.mxu0
        %404 = vdwg.mxu0
        %vm405 = vcmask 64512
        %406 = vst.msk [vmem:[%s166] sm:$0xff] %vm405, %v402
        %407 = vmatprep.subr.mxu0 0.0
        %408 = vmatpush1.msra.mxu0 0.0
        %409 = vmatprep.subr.mxu0 0.0
        %410 = vmatpush1.msra.mxu0 0.0
        %411 = vmatprep.subr.mxu0 0.0
        %412 = vmatpush1.msra.mxu0 0.0
        %413 = vmatprep.subr.mxu0 0.0
        %414 = vmatpush1.msra.mxu0 0.0
        %415 = vmatprep.subr.mxu0 0.0
        %416 = vmatpush1.msra.mxu0 0.0
        %417 = vmatprep.subr.mxu0 0.0
        %418 = vmatpush1.msra.mxu0 0.0
        %419 = vmatprep.subr.mxu0 0.0
        %420 = vmatpush1.msra.mxu0 0.0
        %421 = vmatprep.subr.mxu0 0.0
        %422 = vmatpush1.msra.mxu0 0.0
        %423 = vmatprep.subr.mxu0 0.0
        %424 = vmatpush1.msra.mxu0 0.0
        %425 = vmatprep.subr.mxu0 0.0
        %426 = vmatpush1.msra.mxu0 0.0
        %427 = vmatprep.subr.mxu0 0.0
        %428 = vmatpush1.msra.mxu0 0.0
        %429 = vmatprep.subr.mxu0 0.0
        %430 = vmatpush1.msra.mxu0 0.0
        %431 = vmatprep.subr.mxu0 0.0
        %432 = vmatpush1.msra.mxu0 %v295
        %433 = vmatprep.subr.mxu0 0.0
        %434 = vmatpush1.msra.mxu0 %v292
        %435 = vmatprep.subr.mxu0 0.0
        %436 = vmatpush1.msra.mxu0 %v287
        %437 = vmatprep.subr.mxu0 0.0
        %438 = vmatpush1.msra.mxu0 %v284
        %439 = vmatprep.subr.mxu0 0.0
        %440 = vmatpush2.msra.mxu0 0.0
        %441 = vmatprep.subr.mxu0 0.0
        %442 = vmatpush2.msra.mxu0 0.0
        %443 = vmatprep.subr.mxu0 0.0
        %444 = vmatpush2.msra.mxu0 0.0
        %445 = vmatprep.subr.mxu0 0.0
        %446 = vmatpush2.msra.mxu0 0.0
        %447 = vmatprep.subr.mxu0 0.0
        %448 = vmatpush2.msra.mxu0 0.0
        %449 = vmatprep.subr.mxu0 0.0
        %450 = vmatpush2.msra.mxu0 0.0
        %451 = vmatprep.subr.mxu0 0.0
        %452 = vmatpush2.msra.mxu0 0.0
        %453 = vmatprep.subr.mxu0 0.0
        %454 = vmatpush2.msra.mxu0 0.0
        %455 = vmatprep.subr.mxu0 0.0
        %456 = vmatpush2.msra.mxu0 0.0
        %457 = vmatprep.subr.mxu0 0.0
        %458 = vmatpush2.msra.mxu0 0.0
        %459 = vmatprep.subr.mxu0 0.0
        %460 = vmatpush2.msra.mxu0 0.0
        %461 = vmatprep.subr.mxu0 0.0
        %462 = vmatpush2.msra.mxu0 0.0
        %463 = vmatprep.subr.mxu0 0.0
        %464 = vmatpush2.msra.mxu0 0.0
        %465 = vmatprep.subr.mxu0 0.0
        %466 = vmatpush2.msra.mxu0 0.0
        %467 = vmatprep.subr.mxu0 0.0
        %468 = vmatpush2.msra.mxu0 0.0
        %469 = vmatprep.subr.mxu0 0.0
        %470 = vmatpush2.msra.mxu0 0.0
        %471 = vmatprep.mubr.f32.mxu0 0.0
        %472 = vmatmul.mubr.f32.gmra.mxu0 %v333
        %v473 = vpop.f32.mrf.mxu0
        %v474 = vadd.f32 0.0, %v473
        %v475 = vpop.f32.mrf.mxu0
        %476 = vdwg.mxu0
        %s477 = scalar_lea.vmem %s166, 8 [#allocation2]
        %478 = vst.msk [vmem:[%s477] sm:$0xff] %vm405, %v474
        %479 = vmatprep.subr.mxu0 0.0
        %480 = vmatpush1.msra.mxu0 0.0
        %481 = vmatprep.subr.mxu0 0.0
        %482 = vmatpush1.msra.mxu0 0.0
        %483 = vmatprep.subr.mxu0 0.0
        %484 = vmatpush1.msra.mxu0 0.0
        %485 = vmatprep.subr.mxu0 0.0
        %486 = vmatpush1.msra.mxu0 0.0
        %487 = vmatprep.subr.mxu0 0.0
        %488 = vmatpush1.msra.mxu0 0.0
        %489 = vmatprep.subr.mxu0 0.0
        %490 = vmatpush1.msra.mxu0 0.0
        %491 = vmatprep.subr.mxu0 0.0
        %492 = vmatpush1.msra.mxu0 0.0
        %493 = vmatprep.subr.mxu0 0.0
        %494 = vmatpush1.msra.mxu0 0.0
        %495 = vmatprep.subr.mxu0 0.0
        %496 = vmatpush1.msra.mxu0 0.0
        %497 = vmatprep.subr.mxu0 0.0
        %498 = vmatpush1.msra.mxu0 0.0
        %499 = vmatprep.subr.mxu0 0.0
        %500 = vmatpush1.msra.mxu0 0.0
        %501 = vmatprep.subr.mxu0 0.0
        %502 = vmatpush1.msra.mxu0 0.0
        %503 = vmatprep.subr.mxu0 0.0
        %504 = vmatpush1.msra.mxu0 %v311
        %505 = vmatprep.subr.mxu0 0.0
        %506 = vmatpush1.msra.mxu0 %v308
        %507 = vmatprep.subr.mxu0 0.0
        %508 = vmatpush1.msra.mxu0 %v303
        %509 = vmatprep.subr.mxu0 0.0
        %510 = vmatpush1.msra.mxu0 %v300
        %511 = vmatprep.subr.mxu0 0.0
        %512 = vmatpush2.msra.mxu0 0.0
        %513 = vmatprep.subr.mxu0 0.0
        %514 = vmatpush2.msra.mxu0 0.0
        %515 = vmatprep.subr.mxu0 0.0
        %516 = vmatpush2.msra.mxu0 0.0
        %517 = vmatprep.subr.mxu0 0.0
        %518 = vmatpush2.msra.mxu0 0.0
        %519 = vmatprep.subr.mxu0 0.0
        %520 = vmatpush2.msra.mxu0 0.0
        %521 = vmatprep.subr.mxu0 0.0
        %522 = vmatpush2.msra.mxu0 0.0
        %523 = vmatprep.subr.mxu0 0.0
        %524 = vmatpush2.msra.mxu0 0.0
        %525 = vmatprep.subr.mxu0 0.0
        %526 = vmatpush2.msra.mxu0 0.0
        %527 = vmatprep.subr.mxu0 0.0
        %528 = vmatpush2.msra.mxu0 0.0
        %529 = vmatprep.subr.mxu0 0.0
        %530 = vmatpush2.msra.mxu0 0.0
        %531 = vmatprep.subr.mxu0 0.0
        %532 = vmatpush2.msra.mxu0 0.0
        %533 = vmatprep.subr.mxu0 0.0
        %534 = vmatpush2.msra.mxu0 0.0
        %535 = vmatprep.subr.mxu0 0.0
        %536 = vmatpush2.msra.mxu0 0.0
        %537 = vmatprep.subr.mxu0 0.0
        %538 = vmatpush2.msra.mxu0 0.0
        %539 = vmatprep.subr.mxu0 0.0
        %540 = vmatpush2.msra.mxu0 0.0
        %541 = vmatprep.subr.mxu0 0.0
        %542 = vmatpush2.msra.mxu0 0.0
        %543 = vmatprep.mubr.f32.mxu0 0.0
        %544 = vmatmul.mubr.f32.gmra.mxu0 %v333
        %v545 = vpop.f32.mrf.mxu0
        %v546 = vadd.f32 0.0, %v545
        %v547 = vpop.f32.mrf.mxu0
        %548 = vdwg.mxu0
        %s549 = scalar_lea.vmem %s166, 16 [#allocation2]
        %550 = vst.msk [vmem:[%s549] sm:$0xff] %vm405, %v546
        %551 = vmatprep.subr.mxu0 0.0
        %552 = vmatpush1.msra.mxu0 0.0
        %553 = vmatprep.subr.mxu0 0.0
        %554 = vmatpush1.msra.mxu0 0.0
        %555 = vmatprep.subr.mxu0 0.0
        %556 = vmatpush1.msra.mxu0 0.0
        %557 = vmatprep.subr.mxu0 0.0
        %558 = vmatpush1.msra.mxu0 0.0
        %559 = vmatprep.subr.mxu0 0.0
        %560 = vmatpush1.msra.mxu0 0.0
        %561 = vmatprep.subr.mxu0 0.0
        %562 = vmatpush1.msra.mxu0 0.0
        %563 = vmatprep.subr.mxu0 0.0
        %564 = vmatpush1.msra.mxu0 0.0
        %565 = vmatprep.subr.mxu0 0.0
        %566 = vmatpush1.msra.mxu0 0.0
        %567 = vmatprep.subr.mxu0 0.0
        %568 = vmatpush1.msra.mxu0 0.0
        %569 = vmatprep.subr.mxu0 0.0
        %570 = vmatpush1.msra.mxu0 0.0
        %571 = vmatprep.subr.mxu0 0.0
        %572 = vmatpush1.msra.mxu0 0.0
        %573 = vmatprep.subr.mxu0 0.0
        %574 = vmatpush1.msra.mxu0 0.0
        %575 = vmatprep.subr.mxu0 0.0
        %576 = vmatpush1.msra.mxu0 %v327
        %577 = vmatprep.subr.mxu0 0.0
        %578 = vmatpush1.msra.mxu0 %v324
        %579 = vmatprep.subr.mxu0 0.0
        %580 = vmatpush1.msra.mxu0 %v319
        %581 = vmatprep.subr.mxu0 0.0
        %582 = vmatpush1.msra.mxu0 %v316
        %583 = vmatprep.subr.mxu0 0.0
        %584 = vmatpush2.msra.mxu0 0.0
        %585 = vmatprep.subr.mxu0 0.0
        %586 = vmatpush2.msra.mxu0 0.0
        %587 = vmatprep.subr.mxu0 0.0
        %588 = vmatpush2.msra.mxu0 0.0
        %589 = vmatprep.subr.mxu0 0.0
        %590 = vmatpush2.msra.mxu0 0.0
        %591 = vmatprep.subr.mxu0 0.0
        %592 = vmatpush2.msra.mxu0 0.0
        %593 = vmatprep.subr.mxu0 0.0
        %594 = vmatpush2.msra.mxu0 0.0
        %595 = vmatprep.subr.mxu0 0.0
        %596 = vmatpush2.msra.mxu0 0.0
        %597 = vmatprep.subr.mxu0 0.0
        %598 = vmatpush2.msra.mxu0 0.0
        %599 = vmatprep.subr.mxu0 0.0
        %600 = vmatpush2.msra.mxu0 0.0
        %601 = vmatprep.subr.mxu0 0.0
        %602 = vmatpush2.msra.mxu0 0.0
        %603 = vmatprep.subr.mxu0 0.0
        %604 = vmatpush2.msra.mxu0 0.0
        %605 = vmatprep.subr.mxu0 0.0
        %606 = vmatpush2.msra.mxu0 0.0
        %607 = vmatprep.subr.mxu0 0.0
        %608 = vmatpush2.msra.mxu0 0.0
        %609 = vmatprep.subr.mxu0 0.0
        %610 = vmatpush2.msra.mxu0 0.0
        %611 = vmatprep.subr.mxu0 0.0
        %612 = vmatpush2.msra.mxu0 0.0
        %613 = vmatprep.subr.mxu0 0.0
        %614 = vmatpush2.msra.mxu0 0.0
        %615 = vmatprep.mubr.f32.mxu0 0.0
        %616 = vmatmul.mubr.f32.gmra.mxu0 %v333
        %v617 = vpop.f32.mrf.mxu0
        %v618 = vadd.f32 0.0, %v617
        %v619 = vpop.f32.mrf.mxu0
        %620 = vdwg.mxu0
        %s621 = scalar_lea.vmem %s166, 24 [#allocation2]
        %622 = vst.msk [vmem:[%s621] sm:$0xff] %vm405, %v618
        %s623 = sand.u32 %s93, 1
        %s624 = scalar_lea.sflag [#allocation3], %s623
        %s625 = sand.u32 %s93, 1
        %s626 = smul.addr %s625, 32
        %s627 = scalar_lea.vmem [#allocation2], %s626
        // Predicated region
        $region33: #{tpu_custom_call.1} parent=31 // pred_check
          %p628 = pneg %p103
        $region34: #{tpu_custom_call.1} parent=31 // pred_check_branch
          %630 = sbr.rel (%p628) target = $region36
        $region35: #{tpu_custom_call.1} parent=31 // pred_region
          %s631 = smul.u32 4, %s17
          %s633 = ssub.s32 512, 512
          %634 = vsyncadd %s624, %s633
          %s635 = smul.addr %s631, 128
          %s636 = scalar_lea.hbm %s3, %s635
          %s637 = sshll.u32 %s627, 4
          %s638 = int_to_ptr.vmem [resolvable:$true] %s637
          %643 = dma.vmem_to_hbm [thread:$0]  %s638, 512, %s636, %s624, 128, 128, 8
        $region36: #{tpu_custom_call.1} parent=31 // pred_fallthru
          _
      $region32: #{tpu_custom_call.1} parent=5 // pred_fallthru
        _
      %p644 = scmp.le.s32.totalorder 2, %s12
      // Predicated region
      $region37: #{tpu_custom_call.1} parent=5 // pred_check
        %p645 = pneg %p644
      $region38: #{tpu_custom_call.1} parent=5 // pred_check_branch
        %647 = sbr.rel (%p645) target = $region40
      $region39: #{tpu_custom_call.1} parent=5 // pred_region
        %s648 = ssub.s32 %s12, 2
        // Predicated region
        $region41: #{tpu_custom_call.1} parent=39 // pred_check
          %p649 = pneg %p109
        $region42: #{tpu_custom_call.1} parent=39 // pred_check_branch
          %651 = sbr.rel (%p649) target = $region44
        $region43: #{tpu_custom_call.1} parent=39 // pred_region
          %s652 = sand.u32 %s94, 1
          %s653 = scalar_lea.sflag [#allocation3], %s652
          %s654 = sand.u32 %s94, 1
          %s655 = smul.addr %s654, 32
          %s656 = scalar_lea.vmem [#allocation2], %s655
          %657 = dma.done %s653, 512
        $region44: #{tpu_custom_call.1} parent=39 // pred_fallthru
          _
      $region40: #{tpu_custom_call.1} parent=5 // pred_fallthru
        _
    $region6: #{tpu_custom_call.1} parent=1 // loop_footer
      %s16 = sadd.s32 1, %s12
    $region7: #{tpu_custom_call.1} parent=1 // loop_footer_branch
      %11 = sbr.rel target = $region3
    $region8: #{tpu_custom_call.1} parent=1 // loop_exit
      _
    %658 = vsyncpa [#allocation3], 1
    %s659 = scalar_lea.sflag [#allocation3], 1
    %660 = vsyncpa %s659, 1

</llo_original>
